<compile_context>
chip_gen: v5e
topology: v5e:2x2
jax: 0.10.0
libtpu: 0.0.40
codegen_flags: <defaults>
</compile_context>

<pallas_src>
import functools

import jax
import jax.numpy as jnp
from jax import lax
from jax.experimental import pallas as pl
from jax.experimental.pallas import tpu as pltpu


def _round_up(x, m):
    return x + (-x % m)


# ----------------------------- Pallas kernels -------------------------------

def _mm_kernel(*refs, relu, has_res):
    """One (TM, TN) output tile per grid step; full K in a single MXU pass.
    bf16 A/W inputs, f32 accumulate, bias (+ bf16 residual) (+ ReLU) epilogue,
    bf16 (or f32) output written directly."""
    if has_res:
        a_ref, w_ref, b_ref, r_ref, o_ref = refs
    else:
        a_ref, w_ref, b_ref, o_ref = refs
        r_ref = None

    y = jnp.dot(a_ref[...], w_ref[...], preferred_element_type=jnp.float32)
    y = y + b_ref[...]
    if has_res:
        y = y + r_ref[...].astype(jnp.float32)
    if relu:
        y = jnp.maximum(y, 0.0)
    o_ref[...] = y.astype(o_ref.dtype)


def matmul_bias_act(a, wp, bp, relu, residual=None, out_dtype=jnp.bfloat16):
    """y = act(a @ wp + bp [+ residual]).

    a:  (M, K)   any float dtype (cast to bf16; K-padded here to match wp)
    wp: (Kp, Np) bf16, pre-padded at init (Kp >= K, Kp/Np multiples of 128)
    bp: (1, Np)  f32,  pre-padded at init
    residual: (M, Np) bf16 optional
    Returns (M, Np) in out_dtype (padded channels are kept end-to-end)."""
    M, K = a.shape
    Kp, Np = wp.shape

    TM = min(512, _round_up(M, 16))      # 16: bf16 packs two rows / sublane
    Mp = _round_up(M, TM)
    TN = min(256, Np)                    # >=2 N tiles on 512-ch layers (v7x)
    TK = Kp                              # full K: single MXU pass per tile

    a_p = a.astype(jnp.bfloat16)
    if (Mp, Kp) != (M, K):
        a_p = jnp.pad(a_p, ((0, Mp - M), (0, Kp - K)))

    has_res = residual is not None
    in_specs = [pl.BlockSpec((TM, TK), lambda m, n: (m, 0)),
                pl.BlockSpec((TK, TN), lambda m, n: (0, n)),
                pl.BlockSpec((1, TN), lambda m, n: (0, n))]
    args = [a_p, wp, bp]
    if has_res:
        r_p = residual.astype(jnp.bfloat16)
        if Mp != M:
            r_p = jnp.pad(r_p, ((0, Mp - M), (0, 0)))
        in_specs.append(pl.BlockSpec((TM, TN), lambda m, n: (m, n)))
        args.append(r_p)

    out = pl.pallas_call(
        functools.partial(_mm_kernel, relu=relu, has_res=has_res),
        out_shape=jax.ShapeDtypeStruct((Mp, Np), out_dtype),
        grid_spec=pltpu.PrefetchScalarGridSpec(
            num_scalar_prefetch=0,
            grid=(Mp // TM, Np // TN),
            in_specs=in_specs,
            out_specs=pl.BlockSpec((TM, TN), lambda m, n: (m, n))),
        compiler_params=pltpu.CompilerParams(
            dimension_semantics=("parallel", "parallel"),
            vmem_limit_bytes=48 * 1024 * 1024),
    )(*args)

    return out if Mp == M else out[:M]


def _lstm_fc_kernel(gx_ref, whh_ref, fcw_ref, fcb_ref, tw_ref, h_ref, c_ref):
    """Whole LSTM recurrence (PyTorch gate order i,f,g,o) in one grid step:
    input projection gx precomputed outside; recurrence unrolled over T so the
    LLO scheduler can overlap gate EUP/VPU work with the next h@W_hh MXU push.
    FC head (3-wide, padded to 128 at init) fused into the last-step epilogue."""
    T, B, H4 = gx_ref.shape
    H = H4 // 4
    whh = whh_ref[...]                      # (H, 4H) bf16, loaded once

    def step(t, carry):
        h, c = carry
        gates = gx_ref[t] + jnp.dot(h.astype(jnp.bfloat16), whh,
                                    preferred_element_type=jnp.float32)
        i = jax.nn.sigmoid(gates[:, 0:H])
        f = jax.nn.sigmoid(gates[:, H:2 * H])
        g = jnp.tanh(gates[:, 2 * H:3 * H])
        o = jax.nn.sigmoid(gates[:, 3 * H:4 * H])
        c_new = f * c + i * g
        h_new = o * jnp.tanh(c_new)
        return h_new, c_new

    h0 = jnp.zeros((B, H), jnp.float32)
    c0 = jnp.zeros((B, H), jnp.float32)
    h, c = lax.fori_loop(0, T, step, (h0, c0), unroll=True)

    h_ref[...] = h
    c_ref[...] = c
    tw_ref[...] = (jnp.dot(h.astype(jnp.bfloat16), fcw_ref[...],
                           preferred_element_type=jnp.float32) + fcb_ref[...])


def lstm_fc_forward(feats, lp, fp):
    """feats: (B, T, 512) f32.  Returns (twist (B,3), h (B,H), c (B,H))."""
    B, T, D = feats.shape
    H4 = lp["w_ih_t"].shape[1]
    H = H4 // 4

    # Input projection hoisted out of the recurrence: one MXU-friendly matmul.
    gx = matmul_bias_act(feats.reshape(B * T, D), lp["w_ih_t"], lp["b"],
                         relu=False, out_dtype=jnp.float32)     # (B*T, 4H)
    gx = gx.reshape(B, T, H4).transpose(1, 0, 2)                # (T, B, 4H)

    Nf = fp["w_t"].shape[1]
    twist_p, h_out, c_out = pl.pallas_call(
        _lstm_fc_kernel,
        out_shape=(jax.ShapeDtypeStruct((B, Nf), jnp.float32),
                   jax.ShapeDtypeStruct((B, H), jnp.float32),
                   jax.ShapeDtypeStruct((B, H), jnp.float32)),
        grid_spec=pltpu.PrefetchScalarGridSpec(
            num_scalar_prefetch=0,
            grid=(1,),
            in_specs=[pl.BlockSpec((T, B, H4), lambda i: (0, 0, 0)),
                      pl.BlockSpec((H, H4), lambda i: (0, 0)),
                      pl.BlockSpec((H, Nf), lambda i: (0, 0)),
                      pl.BlockSpec((1, Nf), lambda i: (0, 0))],
            out_specs=(pl.BlockSpec((B, Nf), lambda i: (0, 0)),
                       pl.BlockSpec((B, H), lambda i: (0, 0)),
                       pl.BlockSpec((B, H), lambda i: (0, 0)))),
        compiler_params=pltpu.CompilerParams(
            dimension_semantics=("arbitrary",)),
    )(gx, lp["w_hh_t"], fp["w_t"], fp["b"])
    return twist_p[:, :3], h_out, c_out


# ----------------------------- JAX glue (im2col, net structure) -------------

def im2col_nhwc(x, kh, kw, stride, pad):
    """x: NHWC bf16 -> patches (B*Ho*Wo, kh*kw*C), columns ordered (kh, kw, C)."""
    # TODO(synk): patch extraction is JAX-side (not in-kernel halo loads); bf16
    # halves the traffic but 3x3 convs still duplicate activation bytes 9x.
    B, H, W, C = x.shape
    Ho = (H + 2 * pad - kh) // stride + 1
    Wo = (W + 2 * pad - kw) // stride + 1
    xp = jnp.pad(x, ((0, 0), (pad, pad), (pad, pad), (0, 0)))
    cols = []
    for i in range(kh):
        for j in range(kw):
            cols.append(xp[:, i::stride, j::stride, :][:, :Ho, :Wo, :])
    patches = jnp.stack(cols, axis=3)                # (B, Ho, Wo, kh*kw, C)
    return patches.reshape(B * Ho * Wo, kh * kw * C), Ho, Wo


def conv_bn(x, p, stride, pad, relu, residual=None):
    """x: NHWC bf16 (channels possibly zero-padded to 128-multiple).
    Conv + folded BN (+ optional fused residual) (+ ReLU); output keeps padded
    channels (pads stay exactly 0: zero weight/bias pads + ReLU)."""
    k = p["k"]
    B = x.shape[0]
    Np = p["w2d"].shape[1]
    patches, Ho, Wo = im2col_nhwc(x, k, k, stride, pad)
    res2d = residual.reshape(B * Ho * Wo, Np) if residual is not None else None
    y = matmul_bias_act(patches, p["w2d"], p["bias"], relu, residual=res2d)
    return y.reshape(B, Ho, Wo, Np)


def maxpool_3x3_s2(x):
    # TODO(synk): 3x3/s2 maxpool kept as lax.reduce_window in JAX glue (NHWC).
    return lax.reduce_window(x, jnp.array(-jnp.inf, x.dtype), lax.max,
                             (1, 3, 3, 1), (1, 2, 2, 1),
                             ((0, 0), (1, 1), (1, 1), (0, 0)))


def basic_block(x, p, stride):
    out1 = conv_bn(x, p["conv1"], stride, 1, relu=True)
    if p["ds"] is not None:
        idn = conv_bn(x, p["ds"], stride, 0, relu=False)
    else:
        idn = x
    # conv2 with the residual add + ReLU fused into the matmul epilogue.
    return conv_bn(out1, p["conv2"], 1, 1, relu=True, residual=idn)


def cnn_lstm_forward(x, params):
    """x: (batch, seq, 3, H, W) float32 (NCHW frames, like PyTorch).
    Returns (twist (batch, 3), (h_out (1, batch, hid), c_out (1, batch, hid)))."""
    batch, seq, C, H, W = x.shape
    y = x.reshape(batch * seq, C, H, W).transpose(0, 2, 3, 1)     # NHWC once
    y = y.astype(jnp.bfloat16)                                    # bf16 acts

    # ResNet18 stem
    y = conv_bn(y, params["conv1"], stride=2, pad=3, relu=True)
    y = maxpool_3x3_s2(y)

    # ResNet18 stages
    strides = {"layer1": 1, "layer2": 2, "layer3": 2, "layer4": 2}
    for name in ("layer1", "layer2", "layer3", "layer4"):
        y = basic_block(y, params[name][0], strides[name])
        y = basic_block(y, params[name][1], 1)

    # TODO(synk): adaptive avgpool (1,1) kept as a jnp.mean in JAX glue.
    feats = jnp.mean(y.astype(jnp.float32), axis=(1, 2))          # (B*T, 512)
    feats = feats.reshape(batch, seq, 512)

    twist, h, c = lstm_fc_forward(feats, params["lstm"], params["fc"])
    return twist, (h[None], c[None])


# ----------------------------- deterministic parameters ---------------------

def init_params(key, hidden_size=128):
    keys = iter(jax.random.split(key, 64))

    def conv_bn_p(cout, cin, k, cin_phys=None):
        """Weights reordered once to (kh,kw,Cin_phys)->Cout_phys with BN scale
        folded in, zero-padded in both Cin (to match padded activations) and
        Cout (128-multiple), K padded to 128-multiple, cast to bf16."""
        cin_phys = cin if cin_phys is None else cin_phys
        kw_, ks_, kb_ = jax.random.split(next(keys), 3)
        fan_in = cin * k * k
        w = jax.random.normal(kw_, (cout, cin, k, k), jnp.float32) \
            * (2.0 / fan_in) ** 0.5
        scale = (1.0 + 0.05 * jax.random.normal(ks_, (cout,))).astype(jnp.float32)
        bias = (0.05 * jax.random.normal(kb_, (cout,))).astype(jnp.float32)
        cout_p = _round_up(cout, 128)
        w4 = (w * scale[:, None, None, None]).transpose(2, 3, 1, 0)  # (k,k,cin,cout)
        w4 = jnp.pad(w4, ((0, 0), (0, 0),
                          (0, cin_phys - cin), (0, cout_p - cout)))
        w2d = w4.reshape(k * k * cin_phys, cout_p)
        Kp = _round_up(w2d.shape[0], 128)
        w2d = jnp.pad(w2d, ((0, Kp - w2d.shape[0]), (0, 0))).astype(jnp.bfloat16)
        b2d = jnp.pad(bias, (0, cout_p - cout)).reshape(1, cout_p)
        return {"w2d": w2d, "bias": b2d.astype(jnp.float32), "k": k}

    def block_p(cin, cout, cin_phys, downsample):
        cout_p = _round_up(cout, 128)
        return {
            "conv1": conv_bn_p(cout, cin, 3, cin_phys),
            "conv2": conv_bn_p(cout, cout, 3, cout_p),
            "ds": conv_bn_p(cout, cin, 1, cin_phys) if downsample else None,
        }

    params = {"conv1": conv_bn_p(64, 3, 7)}          # stem: raw 3-ch input
    cfg = [("layer1", 64, 64, False), ("layer2", 64, 128, True),
           ("layer3", 128, 256, True), ("layer4", 256, 512, True)]
    for name, cin, cout, ds in cfg:
        cin_phys = _round_up(cin, 128)
        cout_phys = _round_up(cout, 128)
        params[name] = [block_p(cin, cout, cin_phys, ds),
                        block_p(cout, cout, cout_phys, False)]

    Hh = hidden_size                                  # must be a 128-multiple
    bound = 1.0 / (Hh ** 0.5)
    u = lambda kk, shape: jax.random.uniform(kk, shape, jnp.float32, -bound, bound)
    w_ih = u(next(keys), (4 * Hh, 512))
    w_hh = u(next(keys), (4 * Hh, Hh))
    b_ih = u(next(keys), (4 * Hh,))
    b_hh = u(next(keys), (4 * Hh,))
    params["lstm"] = {
        "w_ih_t": w_ih.T.astype(jnp.bfloat16),                       # (512, 4H)
        "w_hh_t": w_hh.T.astype(jnp.bfloat16),                       # (H, 4H)
        "b": (b_ih + b_hh).reshape(1, 4 * Hh).astype(jnp.float32),
    }
    fc_w = u(next(keys), (3, Hh))
    fc_b = u(next(keys), (3,))
    params["fc"] = {
        "w_t": jnp.pad(fc_w.T, ((0, 0), (0, 128 - 3))).astype(jnp.bfloat16),
        "b": jnp.pad(fc_b, (0, 128 - 3)).reshape(1, 128).astype(jnp.float32),
    }
    return params


# ----------------------------- main ------------------------------------------

if __name__ == "__main__":
    key = jax.random.PRNGKey(0)
    kp, kx = jax.random.split(key)
    params = init_params(kp, hidden_size=128)

    # Small shapes consistent with the module (32 spatial keeps the ResNet18
    # stage structure valid; adaptive avgpool absorbs the difference).
    batch, seq, spatial = 2, 4, 32
    x = jax.random.normal(kx, (batch, seq, 3, spatial, spatial), jnp.float32)

    twist, (h_out, c_out) = cnn_lstm_forward(x, params)
    jax.block_until_ready((twist, h_out, c_out))

    assert twist.shape == (batch, 3)
    assert h_out.shape == (1, batch, 128) and c_out.shape == (1, batch, 128)
    assert bool(jnp.all(jnp.isfinite(twist)))
    print("KERNEL_OK")
</pallas_src>

<mosaic_0001>
module attributes {stable_mosaic.version = 11 : i64} {
  func.func @_mm_kernel(%arg0: i32, %arg1: i32, %arg2: memref<512x256xbf16, #tpu.memory_space<vmem>>, %arg3: memref<256x128xbf16, #tpu.memory_space<vmem>>, %arg4: memref<1x128xf32, #tpu.memory_space<vmem>>, %arg5: memref<512x128xbf16, #tpu.memory_space<vmem>>) attributes {dimension_semantics = [#tpu.dimension_semantics<parallel>, #tpu.dimension_semantics<parallel>], iteration_bounds = array<i64: 4, 1>, scalar_prefetch = 0 : i64, scratch_operands = 0 : i64, tpu.core_type = #tpu.core_type<tc>, window_params = [{transform_indices = @transform_0, window_bounds = array<i64: 512, 256>}, {transform_indices = @transform_1, window_bounds = array<i64: 256, 128>}, {transform_indices = @transform_2, window_bounds = array<i64: 1, 128>}, {transform_indices = @transform_3, window_bounds = array<i64: 512, 128>}]} {
    %c0 = arith.constant 0 : index
    %c0_0 = arith.constant 0 : index
    %0 = vector.load %arg2[%c0, %c0_0] : memref<512x256xbf16, #tpu.memory_space<vmem>>, vector<512x256xbf16>
    %c0_1 = arith.constant 0 : index
    %c0_2 = arith.constant 0 : index
    %1 = vector.load %arg3[%c0_1, %c0_2] : memref<256x128xbf16, #tpu.memory_space<vmem>>, vector<256x128xbf16>
    %cst = arith.constant dense<0.000000e+00> : vector<512x128xf32>
    %2 = tpu.matmul %0, %1, %cst {dimension_numbers = #tpu.dot_dimension_numbers<[1], [0], [0], [1], [0, 0, 1, 1], [], []>} : vector<512x256xbf16>, vector<256x128xbf16>, vector<512x128xf32> -> vector<512x128xf32>
    %c0_3 = arith.constant 0 : index
    %c0_4 = arith.constant 0 : index
    %3 = vector.load %arg4[%c0_3, %c0_4] : memref<1x128xf32, #tpu.memory_space<vmem>>, vector<1x128xf32>
    %4 = vector.broadcast %3 : vector<1x128xf32> to vector<512x128xf32>
    %5 = arith.addf %2, %4 : vector<512x128xf32>
    %cst_5 = arith.constant 0.000000e+00 : f32
    %6 = vector.broadcast %cst_5 : f32 to vector<512x128xf32>
    %7 = arith.maximumf %5, %6 : vector<512x128xf32>
    %8 = arith.truncf %7 : vector<512x128xf32> to vector<512x128xbf16>
    %c0_6 = arith.constant 0 : index
    %c0_7 = arith.constant 0 : index
    %9 = vector.load %arg5[%c0_6, %c0_7] : memref<512x128xbf16, #tpu.memory_space<vmem>>, vector<512x128xbf16>
    tpu.vector_store %arg5[%c0_6, %c0_7], %8 {strides = array<i32>} : memref<512x128xbf16, #tpu.memory_space<vmem>>, vector<512x128xbf16>,
    return
  }
  func.func @transform_0(%arg0: i32, %arg1: i32) -> (i32, i32) {
    %c0_i32 = arith.constant 0 : i32
    %c0_i32_0 = arith.constant 0 : i32
    return %arg0, %c0_i32 : i32, i32
  }
  func.func @transform_1(%arg0: i32, %arg1: i32) -> (i32, i32) {
    %c0_i32 = arith.constant 0 : i32
    %c0_i32_0 = arith.constant 0 : i32
    return %c0_i32, %arg1 : i32, i32
  }
  func.func @transform_2(%arg0: i32, %arg1: i32) -> (i32, i32) {
    %c0_i32 = arith.constant 0 : i32
    %c0_i32_0 = arith.constant 0 : i32
    return %c0_i32, %arg1 : i32, i32
  }
  func.func @transform_3(%arg0: i32, %arg1: i32) -> (i32, i32) {
    %c0_i32 = arith.constant 0 : i32
    return %arg0, %arg1 : i32, i32
  }
}

</mosaic_0001>

<llo_original>
// kernel: tpu_custom_call.1
$region0: #{tpu_custom_call.1}
  #allocation0 [shape = 'u32[]', space=smem, size = 0x4, offset = 0x4, fixed_abs, tag = 'smem constant byte address 0x4 - core index']
  #allocation1 [shape = 'u32[72,128]{1,0:T(1,128)}', space=vmem, size = 0x9000, scoped, tag = 'internal scratch']
  %s0 = inlined_call_operand.hbm [shape: bf16[2048,256], index: 0, kind: input, shape index: {}]
  %s1 = inlined_call_operand.hbm [shape: bf16[256,128], index: 1, kind: input, shape index: {}]
  %s2 = inlined_call_operand.vmem [shape: f32[1,128], index: 2, kind: input, shape index: {}]
  %s3 = inlined_call_operand.hbm [shape: bf16[2048,128], index: 3, kind: output, shape index: {}]
  %s4 = sld [smem:[#allocation0]]
  $region53: #{tpu_custom_call.1} parent=0
    _
  %s6 = ssub.s32 1, %s4
  %s7 = scalar_select 0, %s6, %s4
  $region1: #{tpu_custom_call.1} parent=0
    #allocation2 [shape = 'u8[524288]{0}', space=vmem, size = 0x80000, scoped, tag = 'input window, operand 0']
    #allocation3 [shape = 's32[2]{0}', space=sflag, size = 0x8, scoped, tag = 'scoped memory for tpu_custom_call.1']
    #allocation4 [shape = 's32[2]{0}', space=sflag, size = 0x8, scoped, tag = 'scoped memory for tpu_custom_call.1']
    #allocation5 [shape = 'u8[65536]{0}', space=vmem, size = 0x10000, scoped, tag = 'input window, operand 1, single buffered']
    #allocation6 [shape = 's32[1]{0}', space=sflag, size = 0x4, scoped, tag = 'scoped memory for tpu_custom_call.1']
    #allocation7 [shape = 'u8[262144]{0}', space=vmem, size = 0x40000, scoped, tag = 'output window, operand 0']
    %8 = vsyncpa [#allocation3], 0
    %s9 = scalar_lea.sflag [#allocation3], 1
    %10 = vsyncpa %s9, 0
    %11 = vsyncpa [#allocation6], 0
    %12 = vsyncpa [#allocation4], 0
    %s13 = scalar_lea.sflag [#allocation4], 1
    %14 = vsyncpa %s13, 0
    loop: start=0, step=1, limit=6
    $region2: #{tpu_custom_call.1} parent=1 // loop_pre_header
      _
    $region3: #{tpu_custom_call.1} parent=1 // loop_header
      %s16 = sphi 0, %s20
      %p17 = scmp.ge.s32.totalorder %s16, 6
      %s23 = sphi 0, %s35
      %s24 = sphi 0, %s31
      %s25 = sphi 0, %s23
      %s26 = sphi 0, %s24
      %s27 = sphi 0, %s25
      %s28 = sphi 0, %s26
      %s38 = sphi 0, %s40
      %s41 = sphi 0, %s38
      %s42 = sphi 0, %s41
      %s58 = sphi 0, %s42
      %s64 = sphi 0, %s66
      %s67 = sphi 0, %s64
      %s68 = sphi 0, %s67
      %s84 = sphi 0, %s68
      %s90 = sphi 0, %s92
      %s93 = sphi 0, %s90
      %s94 = sphi 0, %s93
      %s110 = sphi 0, %s94
      %s118 = sphi 0, %s120
      %s121 = sphi 0, %s118
      %s122 = sphi 0, %s121
      %s138 = sphi 0, %s122
    $region4: #{tpu_custom_call.1} parent=1 // loop_header_branch
      %19 = sbr.rel (%p17) target = $region8
    $region5: #{tpu_custom_call.1} parent=1 // loop_body
      %s21 = ssub.s32 %s16, 1
      %s22 = ssub.s32 %s16, 2
      %s29 = sadd.s32 1, %s24
      %p30 = scmp.ge.s32.totalorder %s29, 1
      %s31 = scalar_select %p30, 0, %s29
      %s32 = sadd.s32 1, %s23
      %s33 = scalar_select %p30, %s32, %s23
      %p34 = scmp.ge.s32.totalorder %s33, 4
      %s35 = scalar_select %p34, 0, %s33
      %s36 = ssub.s32 %s23, %s35
      %p37 = scmp.eq.s32.totalorder %s36, 0
      %s39 = sadd.s32 %s38, 1
      %s40 = scalar_select %p37, %s38, %s39
      %p43 = pneg %p37
      %p44 = scmp.eq.s32.totalorder %s16, 3
      %p45 = por %p43, %p44
      %p46 = scmp.ne.s32.totalorder %s38, %s41
      %p47 = scmp.eq.s32.totalorder %s16, 0
      %p48 = por %p46, %p47
      %p49 = scmp.ne.s32.totalorder %s38, %s41
      %p50 = scmp.eq.s32.totalorder %s21, 3
      %p51 = por %p49, %p50
      %p52 = scmp.ne.s32.totalorder %s41, %s42
      %p53 = scmp.eq.s32.totalorder %s21, 0
      %p54 = por %p52, %p53
      %p55 = scmp.ne.s32.totalorder %s41, %s42
      %p56 = scmp.eq.s32.totalorder %s22, 3
      %p57 = por %p55, %p56
      %p59 = scmp.ne.s32.totalorder %s42, %s58
      %p60 = scmp.eq.s32.totalorder %s22, 0
      %p61 = por %p59, %p60
      %s62 = ssub.s32 %s24, %s31
      %p63 = scmp.eq.s32.totalorder %s62, 0
      %s65 = sadd.s32 %s64, 1
      %s66 = scalar_select %p63, %s64, %s65
      %p69 = pneg %p63
      %p70 = scmp.eq.s32.totalorder %s16, 3
      %p71 = por %p69, %p70
      %p72 = scmp.ne.s32.totalorder %s64, %s67
      %p73 = scmp.eq.s32.totalorder %s16, 0
      %p74 = por %p72, %p73
      %p75 = scmp.ne.s32.totalorder %s64, %s67
      %p76 = scmp.eq.s32.totalorder %s21, 3
      %p77 = por %p75, %p76
      %p78 = scmp.ne.s32.totalorder %s67, %s68
      %p79 = scmp.eq.s32.totalorder %s21, 0
      %p80 = por %p78, %p79
      %p81 = scmp.ne.s32.totalorder %s67, %s68
      %p82 = scmp.eq.s32.totalorder %s22, 3
      %p83 = por %p81, %p82
      %p85 = scmp.ne.s32.totalorder %s68, %s84
      %p86 = scmp.eq.s32.totalorder %s22, 0
      %p87 = por %p85, %p86
      %s88 = ssub.s32 %s24, %s31
      %p89 = scmp.eq.s32.totalorder %s88, 0
      %s91 = sadd.s32 %s90, 1
      %s92 = scalar_select %p89, %s90, %s91
      %p95 = pneg %p89
      %p96 = scmp.eq.s32.totalorder %s16, 3
      %p97 = por %p95, %p96
      %p98 = scmp.ne.s32.totalorder %s90, %s93
      %p99 = scmp.eq.s32.totalorder %s16, 0
      %p100 = por %p98, %p99
      %p101 = scmp.ne.s32.totalorder %s90, %s93
      %p102 = scmp.eq.s32.totalorder %s21, 3
      %p103 = por %p101, %p102
      %p104 = scmp.ne.s32.totalorder %s93, %s94
      %p105 = scmp.eq.s32.totalorder %s21, 0
      %p106 = por %p104, %p105
      %p107 = scmp.ne.s32.totalorder %s93, %s94
      %p108 = scmp.eq.s32.totalorder %s22, 3
      %p109 = por %p107, %p108
      %p111 = scmp.ne.s32.totalorder %s94, %s110
      %p112 = scmp.eq.s32.totalorder %s22, 0
      %p113 = por %p111, %p112
      %s114 = ssub.s32 %s23, %s35
      %s115 = ssub.s32 %s24, %s31
      %s116 = sor.u32 %s114, %s115
      %p117 = scmp.eq.s32.totalorder %s116, 0
      %s119 = sadd.s32 %s118, 1
      %s120 = scalar_select %p117, %s118, %s119
      %p123 = pneg %p117
      %p124 = scmp.eq.s32.totalorder %s16, 3
      %p125 = por %p123, %p124
      %p126 = scmp.ne.s32.totalorder %s118, %s121
      %p127 = scmp.eq.s32.totalorder %s16, 0
      %p128 = por %p126, %p127
      %p129 = scmp.ne.s32.totalorder %s118, %s121
      %p130 = scmp.eq.s32.totalorder %s21, 3
      %p131 = por %p129, %p130
      %p132 = scmp.ne.s32.totalorder %s121, %s122
      %p133 = scmp.eq.s32.totalorder %s21, 0
      %p134 = por %p132, %p133
      %p135 = scmp.ne.s32.totalorder %s121, %s122
      %p136 = scmp.eq.s32.totalorder %s22, 3
      %p137 = por %p135, %p136
      %p139 = scmp.ne.s32.totalorder %s122, %s138
      %p140 = scmp.eq.s32.totalorder %s22, 0
      %p141 = por %p139, %p140
      %p142 = scmp.le.s32.totalorder 1, %s16
      %p143 = scmp.lt.s32.totalorder %s16, 5
      %p144 = pnand %p142, %p143
      %p145 = pneg %p144
      // Predicated region
      $region9: #{tpu_custom_call.1} parent=5 // pred_check
        _
      $region10: #{tpu_custom_call.1} parent=5 // pred_check_branch
        %147 = sbr.rel (%p144) target = $region12
      $region11: #{tpu_custom_call.1} parent=5 // pred_region
        %s148 = ssub.s32 %s16, 1
        // Predicated region
        $region13: #{tpu_custom_call.1} parent=11 // pred_check
          %p149 = pneg %p80
        $region14: #{tpu_custom_call.1} parent=11 // pred_check_branch
          %151 = sbr.rel (%p149) target = $region16
        $region15: #{tpu_custom_call.1} parent=11 // pred_region
          %153 = vsyncadd [#allocation6], 0
          %s154 = smul.addr %s26, 4
          %s155 = scalar_lea.hbm %s1, %s154
          %s156 = sshll.u32 %s155, 4
          %s157 = int_to_ptr.hbm [resolvable:$true] %s156
          %s158 = sshll.u32 [#allocation5], 4
          %s159 = int_to_ptr.vmem [resolvable:$true] %s158
          %164 = dma.hbm_to_vmem [thread:$0]  %s157, 2048, %s159, [#allocation6], 64, 64, 4
        $region16: #{tpu_custom_call.1} parent=11 // pred_fallthru
          _
        // Predicated region
        $region17: #{tpu_custom_call.1} parent=11 // pred_check
          %p165 = pneg %p106
        $region18: #{tpu_custom_call.1} parent=11 // pred_check_branch
          %167 = sbr.rel (%p165) target = $region20
        $region19: #{tpu_custom_call.1} parent=11 // pred_region
          %p168 = scmp.lt.s32.totalorder %s26, 0
          %s169 = scalar_select %p168, %s26, 0
          %s170 = scalar_lea.vmem %s2, %s169
        $region20: #{tpu_custom_call.1} parent=11 // pred_fallthru
          _
      $region12: #{tpu_custom_call.1} parent=5 // pred_fallthru
        _
      %p171 = scmp.lt.s32.totalorder %s16, 4
      // Predicated region
      $region21: #{tpu_custom_call.1} parent=5 // pred_check
        %p172 = pneg %p171
      $region22: #{tpu_custom_call.1} parent=5 // pred_check_branch
        %174 = sbr.rel (%p172) target = $region24
      $region23: #{tpu_custom_call.1} parent=5 // pred_region
        // Predicated region
        $region25: #{tpu_custom_call.1} parent=23 // pred_check
          %p175 = pneg %p48
        $region26: #{tpu_custom_call.1} parent=23 // pred_check_branch
          %177 = sbr.rel (%p175) target = $region28
        $region27: #{tpu_custom_call.1} parent=23 // pred_region
          %s178 = sand.u32 %s38, 1
          %s179 = scalar_lea.sflag [#allocation3], %s178
          %s180 = sand.u32 %s38, 1
          %s181 = smul.addr %s180, 512
          %s182 = scalar_lea.vmem [#allocation2], %s181
          %s183 = smul.u32 64, %s23
          %185 = vsyncadd %s179, 0
          %s186 = smul.addr %s183, 2
          %s187 = smul.addr %s186, 4
          %s188 = scalar_lea.hbm %s0, %s187
          %s189 = sshll.u32 %s188, 4
          %s190 = int_to_ptr.hbm [resolvable:$true] %s189
          %s191 = sshll.u32 %s182, 4
          %s192 = int_to_ptr.vmem [resolvable:$true] %s191
          %197 = dma.hbm_to_vmem [thread:$0]  %s190, 8192, %s192, %s179, 128, 128, 8
        $region28: #{tpu_custom_call.1} parent=23 // pred_fallthru
          _
      $region24: #{tpu_custom_call.1} parent=5 // pred_fallthru
        _
      %p198 = scmp.le.s32.totalorder 1, %s16
      %p199 = scmp.lt.s32.totalorder %s16, 5
      %p200 = pnand %p198, %p199
      %p201 = pneg %p200
      // Predicated region
      $region29: #{tpu_custom_call.1} parent=5 // pred_check
        _
      $region30: #{tpu_custom_call.1} parent=5 // pred_check_branch
        %203 = sbr.rel (%p200) target = $region32
      $region31: #{tpu_custom_call.1} parent=5 // pred_region
        %s204 = ssub.s32 %s16, 1
        %s205 = sand.u32 %s41, 1
        %s206 = scalar_lea.sflag [#allocation3], %s205
        %s207 = sand.u32 %s41, 1
        %s208 = smul.addr %s207, 512
        %s209 = scalar_lea.vmem [#allocation2], %s208
        // Predicated region
        $region33: #{tpu_custom_call.1} parent=31 // pred_check
          %p210 = pneg %p54
        $region34: #{tpu_custom_call.1} parent=31 // pred_check_branch
          %212 = sbr.rel (%p210) target = $region36
        $region35: #{tpu_custom_call.1} parent=31 // pred_region
          %214 = dma.done %s206, 8192
        $region36: #{tpu_custom_call.1} parent=31 // pred_fallthru
          _
        // Predicated region
        $region37: #{tpu_custom_call.1} parent=31 // pred_check
          %p215 = pneg %p80
        $region38: #{tpu_custom_call.1} parent=31 // pred_check_branch
          %217 = sbr.rel (%p215) target = $region40
        $region39: #{tpu_custom_call.1} parent=31 // pred_region
          %219 = dma.done [#allocation6], 2048
        $region40: #{tpu_custom_call.1} parent=31 // pred_fallthru
          _
        %s220 = sand.u32 %s41, 1
        %s221 = scalar_lea.sflag [#allocation3], %s220
        %s222 = sand.u32 %s41, 1
        %s223 = smul.addr %s222, 512
        %s224 = scalar_lea.vmem [#allocation2], %s223
        %p225 = pneg %p54
        %p226 = pneg %p51
        %p227 = pneg %p80
        %p228 = pneg %p77
        %p229 = scmp.lt.s32.totalorder %s26, 0
        %s230 = scalar_select %p229, %s26, 0
        %s231 = scalar_lea.vmem %s2, %s230
        %p232 = pneg %p106
        %p233 = pneg %p103
        %p234 = pneg %p134
        %p235 = pneg %p131
        %s236 = sand.u32 %s121, 1
        %s237 = scalar_lea.sflag [#allocation4], %s236
        %s238 = sand.u32 %s121, 1
        %s239 = smul.addr %s238, 256
        %s240 = scalar_lea.vmem [#allocation7], %s239
        %s241 = smul.u32 64, %s25
        %p242 = scmp.lt.s32.totalorder %s26, 0
        %s243 = scalar_select %p242, %s26, 0
        %s244 = scalar_lea.vmem %s2, %s243
        %s245 = smul.u32 64, %s25
        %v246 = vld [vmem:[%s209] sm:$0xff]
        %v247 = vld [vmem:[%s209 + $0x8] sm:$0xff]
        %v248 = vld [vmem:[%s209 + $0x10] sm:$0xff]
        %v249 = vld [vmem:[%s209 + $0x18] sm:$0xff]
        %v250 = vld [vmem:[%s209 + $0x20] sm:$0xff]
        %v251 = vld [vmem:[%s209 + $0x28] sm:$0xff]
        %v252 = vld [vmem:[%s209 + $0x30] sm:$0xff]
        %v253 = vld [vmem:[%s209 + $0x38] sm:$0xff]
        %v254 = vld [vmem:[%s209 + $0x40] sm:$0xff]
        %v255 = vld [vmem:[%s209 + $0x48] sm:$0xff]
        %v256 = vld [vmem:[%s209 + $0x50] sm:$0xff]
        %v257 = vld [vmem:[%s209 + $0x58] sm:$0xff]
        %v258 = vld [vmem:[%s209 + $0x60] sm:$0xff]
        %v259 = vld [vmem:[%s209 + $0x68] sm:$0xff]
        %v260 = vld [vmem:[%s209 + $0x70] sm:$0xff]
        %v261 = vld [vmem:[%s209 + $0x78] sm:$0xff]
        %v262 = vld [vmem:[%s209 + $0x80] sm:$0xff]
        %v263 = vld [vmem:[%s209 + $0x88] sm:$0xff]
        %v264 = vld [vmem:[%s209 + $0x90] sm:$0xff]
        %v265 = vld [vmem:[%s209 + $0x98] sm:$0xff]
        %v266 = vld [vmem:[%s209 + $0xa0] sm:$0xff]
        %v267 = vld [vmem:[%s209 + $0xa8] sm:$0xff]
        %v268 = vld [vmem:[%s209 + $0xb0] sm:$0xff]
        %v269 = vld [vmem:[%s209 + $0xb8] sm:$0xff]
        %v270 = vld [vmem:[%s209 + $0xc0] sm:$0xff]
        %v271 = vld [vmem:[%s209 + $0xc8] sm:$0xff]
        %v272 = vld [vmem:[%s209 + $0xd0] sm:$0xff]
        %v273 = vld [vmem:[%s209 + $0xd8] sm:$0xff]
        %v274 = vld [vmem:[%s209 + $0xe0] sm:$0xff]
        %v275 = vld [vmem:[%s209 + $0xe8] sm:$0xff]
        %v276 = vld [vmem:[%s209 + $0xf0] sm:$0xff]
        %v277 = vld [vmem:[%s209 + $0xf8] sm:$0xff]
        %v278 = vld [vmem:[%s209 + $0x100] sm:$0xff]
        %v279 = vld [vmem:[%s209 + $0x108] sm:$0xff]
        %v280 = vld [vmem:[%s209 + $0x110] sm:$0xff]
        %v281 = vld [vmem:[%s209 + $0x118] sm:$0xff]
        %v282 = vld [vmem:[%s209 + $0x120] sm:$0xff]
        %v283 = vld [vmem:[%s209 + $0x128] sm:$0xff]
        %v284 = vld [vmem:[%s209 + $0x130] sm:$0xff]
        %v285 = vld [vmem:[%s209 + $0x138] sm:$0xff]
        %v286 = vld [vmem:[%s209 + $0x140] sm:$0xff]
        %v287 = vld [vmem:[%s209 + $0x148] sm:$0xff]
        %v288 = vld [vmem:[%s209 + $0x150] sm:$0xff]
        %v289 = vld [vmem:[%s209 + $0x158] sm:$0xff]
        %v290 = vld [vmem:[%s209 + $0x160] sm:$0xff]
        %v291 = vld [vmem:[%s209 + $0x168] sm:$0xff]
        %v292 = vld [vmem:[%s209 + $0x170] sm:$0xff]
        %v293 = vld [vmem:[%s209 + $0x178] sm:$0xff]
        %v294 = vld [vmem:[%s209 + $0x180] sm:$0xff]
        %v295 = vld [vmem:[%s209 + $0x188] sm:$0xff]
        %v296 = vld [vmem:[%s209 + $0x190] sm:$0xff]
        %v297 = vld [vmem:[%s209 + $0x198] sm:$0xff]
        %v298 = vld [vmem:[%s209 + $0x1a0] sm:$0xff]
        %v299 = vld [vmem:[%s209 + $0x1a8] sm:$0xff]
        %v300 = vld [vmem:[%s209 + $0x1b0] sm:$0xff]
        %v301 = vld [vmem:[%s209 + $0x1b8] sm:$0xff]
        %v302 = vld [vmem:[%s209 + $0x1c0] sm:$0xff]
        %v303 = vld [vmem:[%s209 + $0x1c8] sm:$0xff]
        %v304 = vld [vmem:[%s209 + $0x1d0] sm:$0xff]
        %v305 = vld [vmem:[%s209 + $0x1d8] sm:$0xff]
        %v306 = vld [vmem:[%s209 + $0x1e0] sm:$0xff]
        %v307 = vld [vmem:[%s209 + $0x1e8] sm:$0xff]
        %v308 = vld [vmem:[%s209 + $0x1f0] sm:$0xff]
        %v309 = vld [vmem:[%s209 + $0x1f8] sm:$0xff]
        %v310 = vld [vmem:[#allocation5] sm:$0xf]
        %v311 = vld [vmem:[#allocation5 + $0x4] sm:$0xf]
        %v312 = vld [vmem:[#allocation5 + $0x8] sm:$0xf]
        %v313 = vld [vmem:[#allocation5 + $0xc] sm:$0xf]
        %v314 = vld [vmem:[#allocation5 + $0x10] sm:$0xf]
        %v315 = vld [vmem:[#allocation5 + $0x14] sm:$0xf]
        %v316 = vld [vmem:[#allocation5 + $0x18] sm:$0xf]
        %v317 = vld [vmem:[#allocation5 + $0x1c] sm:$0xf]
        %v318 = vld [vmem:[#allocation5 + $0x20] sm:$0xf]
        %v319 = vld [vmem:[#allocation5 + $0x24] sm:$0xf]
        %v320 = vld [vmem:[#allocation5 + $0x28] sm:$0xf]
        %v321 = vld [vmem:[#allocation5 + $0x2c] sm:$0xf]
        %v322 = vld [vmem:[#allocation5 + $0x30] sm:$0xf]
        %v323 = vld [vmem:[#allocation5 + $0x34] sm:$0xf]
        %v324 = vld [vmem:[#allocation5 + $0x38] sm:$0xf]
        %v325 = vld [vmem:[#allocation5 + $0x3c] sm:$0xf]
        %v326 = vld [vmem:[#allocation5 + $0x40] sm:$0xf]
        %v327 = vld [vmem:[#allocation5 + $0x44] sm:$0xf]
        %v328 = vld [vmem:[#allocation5 + $0x48] sm:$0xf]
        %v329 = vld [vmem:[#allocation5 + $0x4c] sm:$0xf]
        %v330 = vld [vmem:[#allocation5 + $0x50] sm:$0xf]
        %v331 = vld [vmem:[#allocation5 + $0x54] sm:$0xf]
        %v332 = vld [vmem:[#allocation5 + $0x58] sm:$0xf]
        %v333 = vld [vmem:[#allocation5 + $0x5c] sm:$0xf]
        %v334 = vld [vmem:[#allocation5 + $0x60] sm:$0xf]
        %v335 = vld [vmem:[#allocation5 + $0x64] sm:$0xf]
        %v336 = vld [vmem:[#allocation5 + $0x68] sm:$0xf]
        %v337 = vld [vmem:[#allocation5 + $0x6c] sm:$0xf]
        %v338 = vld [vmem:[#allocation5 + $0x70] sm:$0xf]
        %v339 = vld [vmem:[#allocation5 + $0x74] sm:$0xf]
        %v340 = vld [vmem:[#allocation5 + $0x78] sm:$0xf]
        %v341 = vld [vmem:[#allocation5 + $0x7c] sm:$0xf]
        %v342 = vld [vmem:[%s244] sm:$0x1]
        %v344 = vperm.slane %v342, 0
        %v410 = vunpack.c.l.b16 %v246
        %v411 = vunpack.c.h.b16 %v246
        %v412 = vunpack.c.l.b16 %v247
        %v413 = vunpack.c.h.b16 %v247
        %v414 = vunpack.c.l.b16 %v248
        %v415 = vunpack.c.h.b16 %v248
        %v416 = vunpack.c.l.b16 %v249
        %v417 = vunpack.c.h.b16 %v249
        %v418 = vunpack.c.l.b16 %v250
        %v419 = vunpack.c.h.b16 %v250
        %v420 = vunpack.c.l.b16 %v251
        %v421 = vunpack.c.h.b16 %v251
        %v422 = vunpack.c.l.b16 %v252
        %v423 = vunpack.c.h.b16 %v252
        %v424 = vunpack.c.l.b16 %v253
        %v425 = vunpack.c.h.b16 %v253
        %v426 = vunpack.c.l.b16 %v254
        %v427 = vunpack.c.h.b16 %v254
        %v428 = vunpack.c.l.b16 %v255
        %v429 = vunpack.c.h.b16 %v255
        %v430 = vunpack.c.l.b16 %v256
        %v431 = vunpack.c.h.b16 %v256
        %v432 = vunpack.c.l.b16 %v257
        %v433 = vunpack.c.h.b16 %v257
        %v434 = vunpack.c.l.b16 %v258
        %v435 = vunpack.c.h.b16 %v258
        %v436 = vunpack.c.l.b16 %v259
        %v437 = vunpack.c.h.b16 %v259
        %v438 = vunpack.c.l.b16 %v260
        %v439 = vunpack.c.h.b16 %v260
        %v440 = vunpack.c.l.b16 %v261
        %v441 = vunpack.c.h.b16 %v261
        %v442 = vunpack.c.l.b16 %v262
        %v443 = vunpack.c.h.b16 %v262
        %v444 = vunpack.c.l.b16 %v263
        %v445 = vunpack.c.h.b16 %v263
        %v446 = vunpack.c.l.b16 %v264
        %v447 = vunpack.c.h.b16 %v264
        %v448 = vunpack.c.l.b16 %v265
        %v449 = vunpack.c.h.b16 %v265
        %v450 = vunpack.c.l.b16 %v266
        %v451 = vunpack.c.h.b16 %v266
        %v452 = vunpack.c.l.b16 %v267
        %v453 = vunpack.c.h.b16 %v267
        %v454 = vunpack.c.l.b16 %v268
        %v455 = vunpack.c.h.b16 %v268
        %v456 = vunpack.c.l.b16 %v269
        %v457 = vunpack.c.h.b16 %v269
        %v458 = vunpack.c.l.b16 %v270
        %v459 = vunpack.c.h.b16 %v270
        %v460 = vunpack.c.l.b16 %v271
        %v461 = vunpack.c.h.b16 %v271
        %v462 = vunpack.c.l.b16 %v272
        %v463 = vunpack.c.h.b16 %v272
        %v464 = vunpack.c.l.b16 %v273
        %v465 = vunpack.c.h.b16 %v273
        %v466 = vunpack.c.l.b16 %v274
        %v467 = vunpack.c.h.b16 %v274
        %v468 = vunpack.c.l.b16 %v275
        %v469 = vunpack.c.h.b16 %v275
        %v470 = vunpack.c.l.b16 %v276
        %v471 = vunpack.c.h.b16 %v276
        %v472 = vunpack.c.l.b16 %v277
        %v473 = vunpack.c.h.b16 %v277
        %v474 = vunpack.c.l.b16 %v278
        %v475 = vunpack.c.h.b16 %v278
        %v476 = vunpack.c.l.b16 %v279
        %v477 = vunpack.c.h.b16 %v279
        %v478 = vunpack.c.l.b16 %v280
        %v479 = vunpack.c.h.b16 %v280
        %v480 = vunpack.c.l.b16 %v281
        %v481 = vunpack.c.h.b16 %v281
        %v482 = vunpack.c.l.b16 %v282
        %v483 = vunpack.c.h.b16 %v282
        %v484 = vunpack.c.l.b16 %v283
        %v485 = vunpack.c.h.b16 %v283
        %v486 = vunpack.c.l.b16 %v284
        %v487 = vunpack.c.h.b16 %v284
        %v488 = vunpack.c.l.b16 %v285
        %v489 = vunpack.c.h.b16 %v285
        %v490 = vunpack.c.l.b16 %v286
        %v491 = vunpack.c.h.b16 %v286
        %v492 = vunpack.c.l.b16 %v287
        %v493 = vunpack.c.h.b16 %v287
        %v494 = vunpack.c.l.b16 %v288
        %v495 = vunpack.c.h.b16 %v288
        %v496 = vunpack.c.l.b16 %v289
        %v497 = vunpack.c.h.b16 %v289
        %v498 = vunpack.c.l.b16 %v290
        %v499 = vunpack.c.h.b16 %v290
        %v500 = vunpack.c.l.b16 %v291
        %v501 = vunpack.c.h.b16 %v291
        %v502 = vunpack.c.l.b16 %v292
        %v503 = vunpack.c.h.b16 %v292
        %v504 = vunpack.c.l.b16 %v293
        %v505 = vunpack.c.h.b16 %v293
        %v506 = vunpack.c.l.b16 %v294
        %v507 = vunpack.c.h.b16 %v294
        %v508 = vunpack.c.l.b16 %v295
        %v509 = vunpack.c.h.b16 %v295
        %v510 = vunpack.c.l.b16 %v296
        %v511 = vunpack.c.h.b16 %v296
        %v512 = vunpack.c.l.b16 %v297
        %v513 = vunpack.c.h.b16 %v297
        %v514 = vunpack.c.l.b16 %v298
        %v515 = vunpack.c.h.b16 %v298
        %v516 = vunpack.c.l.b16 %v299
        %v517 = vunpack.c.h.b16 %v299
        %v518 = vunpack.c.l.b16 %v300
        %v519 = vunpack.c.h.b16 %v300
        %v520 = vunpack.c.l.b16 %v301
        %v521 = vunpack.c.h.b16 %v301
        %v522 = vunpack.c.l.b16 %v302
        %v523 = vunpack.c.h.b16 %v302
        %v524 = vunpack.c.l.b16 %v303
        %v525 = vunpack.c.h.b16 %v303
        %v526 = vunpack.c.l.b16 %v304
        %v527 = vunpack.c.h.b16 %v304
        %v528 = vunpack.c.l.b16 %v305
        %v529 = vunpack.c.h.b16 %v305
        %v530 = vunpack.c.l.b16 %v306
        %v531 = vunpack.c.h.b16 %v306
        %v532 = vunpack.c.l.b16 %v307
        %v533 = vunpack.c.h.b16 %v307
        %v534 = vunpack.c.l.b16 %v308
        %v535 = vunpack.c.h.b16 %v308
        %v536 = vunpack.c.l.b16 %v309
        %v537 = vunpack.c.h.b16 %v309
        %v538 = vpack.c.b16 %v412, %v410
        %v539 = vpack.c.b16 %v413, %v411
        %v540 = vpack.c.b16 %v416, %v414
        %v541 = vpack.c.b16 %v417, %v415
        %v542 = vpack.c.b16 %v420, %v418
        %v543 = vpack.c.b16 %v421, %v419
        %v544 = vpack.c.b16 %v424, %v422
        %v545 = vpack.c.b16 %v425, %v423
        %v546 = vpack.c.b16 %v428, %v426
        %v547 = vpack.c.b16 %v429, %v427
        %v548 = vpack.c.b16 %v432, %v430
        %v549 = vpack.c.b16 %v433, %v431
        %v550 = vpack.c.b16 %v436, %v434
        %v551 = vpack.c.b16 %v437, %v435
        %v552 = vpack.c.b16 %v440, %v438
        %v553 = vpack.c.b16 %v441, %v439
        %v554 = vpack.c.b16 %v444, %v442
        %v555 = vpack.c.b16 %v445, %v443
        %v556 = vpack.c.b16 %v448, %v446
        %v557 = vpack.c.b16 %v449, %v447
        %v558 = vpack.c.b16 %v452, %v450
        %v559 = vpack.c.b16 %v453, %v451
        %v560 = vpack.c.b16 %v456, %v454
        %v561 = vpack.c.b16 %v457, %v455
        %v562 = vpack.c.b16 %v460, %v458
        %v563 = vpack.c.b16 %v461, %v459
        %v564 = vpack.c.b16 %v464, %v462
        %v565 = vpack.c.b16 %v465, %v463
        %v566 = vpack.c.b16 %v468, %v466
        %v567 = vpack.c.b16 %v469, %v467
        %v568 = vpack.c.b16 %v472, %v470
        %v569 = vpack.c.b16 %v473, %v471
        %v570 = vpack.c.b16 %v476, %v474
        %v571 = vpack.c.b16 %v477, %v475
        %v572 = vpack.c.b16 %v480, %v478
        %v573 = vpack.c.b16 %v481, %v479
        %v574 = vpack.c.b16 %v484, %v482
        %v575 = vpack.c.b16 %v485, %v483
        %v576 = vpack.c.b16 %v488, %v486
        %v577 = vpack.c.b16 %v489, %v487
        %v578 = vpack.c.b16 %v492, %v490
        %v579 = vpack.c.b16 %v493, %v491
        %v580 = vpack.c.b16 %v496, %v494
        %v581 = vpack.c.b16 %v497, %v495
        %v582 = vpack.c.b16 %v500, %v498
        %v583 = vpack.c.b16 %v501, %v499
        %v584 = vpack.c.b16 %v504, %v502
        %v585 = vpack.c.b16 %v505, %v503
        %v586 = vpack.c.b16 %v508, %v506
        %v587 = vpack.c.b16 %v509, %v507
        %v588 = vpack.c.b16 %v512, %v510
        %v589 = vpack.c.b16 %v513, %v511
        %v590 = vpack.c.b16 %v516, %v514
        %v591 = vpack.c.b16 %v517, %v515
        %v592 = vpack.c.b16 %v520, %v518
        %v593 = vpack.c.b16 %v521, %v519
        %v594 = vpack.c.b16 %v524, %v522
        %v595 = vpack.c.b16 %v525, %v523
        %v596 = vpack.c.b16 %v528, %v526
        %v597 = vpack.c.b16 %v529, %v527
        %v598 = vpack.c.b16 %v532, %v530
        %v599 = vpack.c.b16 %v533, %v531
        %v600 = vpack.c.b16 %v536, %v534
        %v601 = vpack.c.b16 %v537, %v535
        %v698 = vunpack.c.l.b16 %v310
        %v699 = vunpack.c.l.b16 %v311
        %v700 = vunpack.c.l.b16 %v312
        %v701 = vunpack.c.l.b16 %v313
        %v702 = vunpack.c.l.b16 %v314
        %v703 = vunpack.c.l.b16 %v315
        %v704 = vunpack.c.l.b16 %v316
        %v705 = vunpack.c.l.b16 %v317
        %v706 = vunpack.c.l.b16 %v318
        %v707 = vunpack.c.l.b16 %v319
        %v708 = vunpack.c.l.b16 %v320
        %v709 = vunpack.c.l.b16 %v321
        %v710 = vunpack.c.l.b16 %v322
        %v711 = vunpack.c.l.b16 %v323
        %v712 = vunpack.c.l.b16 %v324
        %v713 = vunpack.c.l.b16 %v325
        %v714 = vunpack.c.l.b16 %v326
        %v715 = vunpack.c.l.b16 %v327
        %v716 = vunpack.c.l.b16 %v328
        %v717 = vunpack.c.l.b16 %v329
        %v718 = vunpack.c.l.b16 %v330
        %v719 = vunpack.c.l.b16 %v331
        %v720 = vunpack.c.l.b16 %v332
        %v721 = vunpack.c.l.b16 %v333
        %v722 = vunpack.c.l.b16 %v334
        %v723 = vunpack.c.l.b16 %v335
        %v724 = vunpack.c.l.b16 %v336
        %v725 = vunpack.c.l.b16 %v337
        %v726 = vunpack.c.l.b16 %v338
        %v727 = vunpack.c.l.b16 %v339
        %v728 = vunpack.c.l.b16 %v340
        %v729 = vunpack.c.l.b16 %v341
        %v730 = vpack.c.b16 %v699, %v698
        %v731 = vpack.c.b16 %v701, %v700
        %v732 = vpack.c.b16 %v703, %v702
        %v733 = vpack.c.b16 %v705, %v704
        %v734 = vpack.c.b16 %v707, %v706
        %v735 = vpack.c.b16 %v709, %v708
        %v736 = vpack.c.b16 %v711, %v710
        %v737 = vpack.c.b16 %v713, %v712
        %v738 = vpack.c.b16 %v715, %v714
        %v739 = vpack.c.b16 %v717, %v716
        %v740 = vpack.c.b16 %v719, %v718
        %v741 = vpack.c.b16 %v721, %v720
        %v742 = vpack.c.b16 %v723, %v722
        %v743 = vpack.c.b16 %v725, %v724
        %v744 = vpack.c.b16 %v727, %v726
        %v745 = vpack.c.b16 %v729, %v728
        %762 = vmatpush.bf16.msra.mxu0 %v737
        %763 = vmatpush.bf16.msra.mxu0 %v736
        %764 = vmatpush.bf16.msra.mxu0 %v735
        %765 = vmatpush.bf16.msra.mxu0 %v734
        %766 = vmatpush.bf16.msra.mxu0 %v733
        %767 = vmatpush.bf16.msra.mxu0 %v732
        %768 = vmatpush.bf16.msra.mxu0 %v731
        %769 = vmatpush.bf16.msra.mxu0 %v730
        %770 = vmatmul.bf16.gmra.mxu0 %v538
        %v771 = vpop.f32.mrf.mxu0
        %v772 = vadd.f32 %v344, %v771
        %v773 = vpop.f32.mrf.mxu0
        %v774 = vadd.f32 %v344, %v773
        %775 = vmatmul.bf16.gmra.mxu0 %v540
        %v776 = vpop.f32.mrf.mxu0
        %v777 = vadd.f32 %v344, %v776
        %v778 = vpop.f32.mrf.mxu0
        %v779 = vadd.f32 %v344, %v778
        %780 = vmatmul.bf16.gmra.mxu0 %v542
        %v781 = vpop.f32.mrf.mxu0
        %v782 = vadd.f32 %v344, %v781
        %v783 = vpop.f32.mrf.mxu0
        %v784 = vadd.f32 %v344, %v783
        %785 = vmatmul.bf16.gmra.mxu0 %v544
        %v786 = vpop.f32.mrf.mxu0
        %v787 = vadd.f32 %v344, %v786
        %v788 = vpop.f32.mrf.mxu0
        %v789 = vadd.f32 %v344, %v788
        %790 = vmatmul.bf16.gmra.mxu0 %v546
        %v791 = vpop.f32.mrf.mxu0
        %v792 = vadd.f32 %v344, %v791
        %v793 = vpop.f32.mrf.mxu0
        %v794 = vadd.f32 %v344, %v793
        %795 = vmatmul.bf16.gmra.mxu0 %v548
        %v796 = vpop.f32.mrf.mxu0
        %v797 = vadd.f32 %v344, %v796
        %v798 = vpop.f32.mrf.mxu0
        %v799 = vadd.f32 %v344, %v798
        %800 = vmatmul.bf16.gmra.mxu0 %v550
        %v801 = vpop.f32.mrf.mxu0
        %v802 = vadd.f32 %v344, %v801
        %v803 = vpop.f32.mrf.mxu0
        %v804 = vadd.f32 %v344, %v803
        %805 = vmatmul.bf16.gmra.mxu0 %v552
        %v806 = vpop.f32.mrf.mxu0
        %v807 = vadd.f32 %v344, %v806
        %v808 = vpop.f32.mrf.mxu0
        %v809 = vadd.f32 %v344, %v808
        %810 = vmatmul.bf16.gmra.mxu0 %v554
        %v811 = vpop.f32.mrf.mxu0
        %v812 = vadd.f32 %v344, %v811
        %v813 = vpop.f32.mrf.mxu0
        %v814 = vadd.f32 %v344, %v813
        %815 = vmatmul.bf16.gmra.mxu0 %v556
        %v816 = vpop.f32.mrf.mxu0
        %v817 = vadd.f32 %v344, %v816
        %v818 = vpop.f32.mrf.mxu0
        %v819 = vadd.f32 %v344, %v818
        %820 = vmatmul.bf16.gmra.mxu0 %v558
        %v821 = vpop.f32.mrf.mxu0
        %v822 = vadd.f32 %v344, %v821
        %v823 = vpop.f32.mrf.mxu0
        %v824 = vadd.f32 %v344, %v823
        %825 = vmatmul.bf16.gmra.mxu0 %v560
        %v826 = vpop.f32.mrf.mxu0
        %v827 = vadd.f32 %v344, %v826
        %v828 = vpop.f32.mrf.mxu0
        %v829 = vadd.f32 %v344, %v828
        %830 = vmatmul.bf16.gmra.mxu0 %v562
        %v831 = vpop.f32.mrf.mxu0
        %v832 = vadd.f32 %v344, %v831
        %v833 = vpop.f32.mrf.mxu0
        %v834 = vadd.f32 %v344, %v833
        %835 = vmatmul.bf16.gmra.mxu0 %v564
        %v836 = vpop.f32.mrf.mxu0
        %v837 = vadd.f32 %v344, %v836
        %v838 = vpop.f32.mrf.mxu0
        %v839 = vadd.f32 %v344, %v838
        %840 = vmatmul.bf16.gmra.mxu0 %v566
        %v841 = vpop.f32.mrf.mxu0
        %v842 = vadd.f32 %v344, %v841
        %v843 = vpop.f32.mrf.mxu0
        %v844 = vadd.f32 %v344, %v843
        %845 = vmatmul.bf16.gmra.mxu0 %v568
        %v846 = vpop.f32.mrf.mxu0
        %v847 = vadd.f32 %v344, %v846
        %v848 = vpop.f32.mrf.mxu0
        %v849 = vadd.f32 %v344, %v848
        %850 = vmatmul.bf16.gmra.mxu0 %v570
        %v851 = vpop.f32.mrf.mxu0
        %v852 = vadd.f32 %v344, %v851
        %v853 = vpop.f32.mrf.mxu0
        %v854 = vadd.f32 %v344, %v853
        %855 = vmatmul.bf16.gmra.mxu0 %v572
        %v856 = vpop.f32.mrf.mxu0
        %v857 = vadd.f32 %v344, %v856
        %v858 = vpop.f32.mrf.mxu0
        %v859 = vadd.f32 %v344, %v858
        %860 = vmatmul.bf16.gmra.mxu0 %v574
        %v861 = vpop.f32.mrf.mxu0
        %v862 = vadd.f32 %v344, %v861
        %v863 = vpop.f32.mrf.mxu0
        %v864 = vadd.f32 %v344, %v863
        %865 = vmatmul.bf16.gmra.mxu0 %v576
        %v866 = vpop.f32.mrf.mxu0
        %v867 = vadd.f32 %v344, %v866
        %v868 = vpop.f32.mrf.mxu0
        %v869 = vadd.f32 %v344, %v868
        %870 = vmatmul.bf16.gmra.mxu0 %v578
        %v871 = vpop.f32.mrf.mxu0
        %v872 = vadd.f32 %v344, %v871
        %v873 = vpop.f32.mrf.mxu0
        %v874 = vadd.f32 %v344, %v873
        %875 = vmatmul.bf16.gmra.mxu0 %v580
        %v876 = vpop.f32.mrf.mxu0
        %v877 = vadd.f32 %v344, %v876
        %v878 = vpop.f32.mrf.mxu0
        %v879 = vadd.f32 %v344, %v878
        %880 = vmatmul.bf16.gmra.mxu0 %v582
        %v881 = vpop.f32.mrf.mxu0
        %v882 = vadd.f32 %v344, %v881
        %v883 = vpop.f32.mrf.mxu0
        %v884 = vadd.f32 %v344, %v883
        %885 = vmatmul.bf16.gmra.mxu0 %v584
        %v886 = vpop.f32.mrf.mxu0
        %v887 = vadd.f32 %v344, %v886
        %v888 = vpop.f32.mrf.mxu0
        %v889 = vadd.f32 %v344, %v888
        %890 = vmatmul.bf16.gmra.mxu0 %v586
        %v891 = vpop.f32.mrf.mxu0
        %v892 = vadd.f32 %v344, %v891
        %v893 = vpop.f32.mrf.mxu0
        %v894 = vadd.f32 %v344, %v893
        %895 = vmatmul.bf16.gmra.mxu0 %v588
        %v896 = vpop.f32.mrf.mxu0
        %v897 = vadd.f32 %v344, %v896
        %v898 = vpop.f32.mrf.mxu0
        %v899 = vadd.f32 %v344, %v898
        %900 = vmatmul.bf16.gmra.mxu0 %v590
        %v901 = vpop.f32.mrf.mxu0
        %v902 = vadd.f32 %v344, %v901
        %v903 = vpop.f32.mrf.mxu0
        %v904 = vadd.f32 %v344, %v903
        %905 = vmatmul.bf16.gmra.mxu0 %v592
        %v906 = vpop.f32.mrf.mxu0
        %v907 = vadd.f32 %v344, %v906
        %v908 = vpop.f32.mrf.mxu0
        %v909 = vadd.f32 %v344, %v908
        %910 = vmatmul.bf16.gmra.mxu0 %v594
        %v911 = vpop.f32.mrf.mxu0
        %v912 = vadd.f32 %v344, %v911
        %v913 = vpop.f32.mrf.mxu0
        %v914 = vadd.f32 %v344, %v913
        %915 = vmatmul.bf16.gmra.mxu0 %v596
        %v916 = vpop.f32.mrf.mxu0
        %v917 = vadd.f32 %v344, %v916
        %v918 = vpop.f32.mrf.mxu0
        %v919 = vadd.f32 %v344, %v918
        %920 = vmatmul.bf16.gmra.mxu0 %v598
        %v921 = vpop.f32.mrf.mxu0
        %v922 = vadd.f32 %v344, %v921
        %v923 = vpop.f32.mrf.mxu0
        %v924 = vadd.f32 %v344, %v923
        %925 = vmatmul.bf16.gmra.mxu0 %v600
        %v926 = vpop.f32.mrf.mxu0
        %v927 = vadd.f32 %v344, %v926
        %v928 = vpop.f32.mrf.mxu0
        %v929 = vadd.f32 %v344, %v928
        %930 = vdwg.mxu0
        %931 = vmatpush.bf16.msra.mxu0 %v745
        %932 = vmatpush.bf16.msra.mxu0 %v744
        %933 = vmatpush.bf16.msra.mxu0 %v743
        %934 = vmatpush.bf16.msra.mxu0 %v742
        %935 = vmatpush.bf16.msra.mxu0 %v741
        %936 = vmatpush.bf16.msra.mxu0 %v740
        %937 = vmatpush.bf16.msra.mxu0 %v739
        %938 = vmatpush.bf16.msra.mxu0 %v738
        %939 = vmatmul.bf16.gmra.mxu0 %v539
        %v940 = vpop.f32.mrf.mxu0
        %v941 = vadd.f32 %v772, %v940
        %v942 = vpop.f32.mrf.mxu0
        %v943 = vadd.f32 %v774, %v942
        %944 = vmatmul.bf16.gmra.mxu0 %v541
        %v945 = vpop.f32.mrf.mxu0
        %v946 = vadd.f32 %v777, %v945
        %v947 = vpop.f32.mrf.mxu0
        %v948 = vadd.f32 %v779, %v947
        %949 = vmatmul.bf16.gmra.mxu0 %v543
        %v950 = vpop.f32.mrf.mxu0
        %v951 = vadd.f32 %v782, %v950
        %v952 = vpop.f32.mrf.mxu0
        %v953 = vadd.f32 %v784, %v952
        %954 = vmatmul.bf16.gmra.mxu0 %v545
        %v955 = vpop.f32.mrf.mxu0
        %v956 = vadd.f32 %v787, %v955
        %v957 = vpop.f32.mrf.mxu0
        %v958 = vadd.f32 %v789, %v957
        %959 = vmatmul.bf16.gmra.mxu0 %v547
        %v960 = vpop.f32.mrf.mxu0
        %v961 = vadd.f32 %v792, %v960
        %v962 = vpop.f32.mrf.mxu0
        %v963 = vadd.f32 %v794, %v962
        %964 = vmatmul.bf16.gmra.mxu0 %v549
        %v965 = vpop.f32.mrf.mxu0
        %v966 = vadd.f32 %v797, %v965
        %v967 = vpop.f32.mrf.mxu0
        %v968 = vadd.f32 %v799, %v967
        %969 = vmatmul.bf16.gmra.mxu0 %v551
        %v970 = vpop.f32.mrf.mxu0
        %v971 = vadd.f32 %v802, %v970
        %v972 = vpop.f32.mrf.mxu0
        %v973 = vadd.f32 %v804, %v972
        %974 = vmatmul.bf16.gmra.mxu0 %v553
        %v975 = vpop.f32.mrf.mxu0
        %v976 = vadd.f32 %v807, %v975
        %v977 = vpop.f32.mrf.mxu0
        %v978 = vadd.f32 %v809, %v977
        %979 = vmatmul.bf16.gmra.mxu0 %v555
        %v980 = vpop.f32.mrf.mxu0
        %v981 = vadd.f32 %v812, %v980
        %v982 = vpop.f32.mrf.mxu0
        %v983 = vadd.f32 %v814, %v982
        %984 = vmatmul.bf16.gmra.mxu0 %v557
        %v985 = vpop.f32.mrf.mxu0
        %v986 = vadd.f32 %v817, %v985
        %v987 = vpop.f32.mrf.mxu0
        %v988 = vadd.f32 %v819, %v987
        %989 = vmatmul.bf16.gmra.mxu0 %v559
        %v990 = vpop.f32.mrf.mxu0
        %v991 = vadd.f32 %v822, %v990
        %v992 = vpop.f32.mrf.mxu0
        %v993 = vadd.f32 %v824, %v992
        %994 = vmatmul.bf16.gmra.mxu0 %v561
        %v995 = vpop.f32.mrf.mxu0
        %v996 = vadd.f32 %v827, %v995
        %v997 = vpop.f32.mrf.mxu0
        %v998 = vadd.f32 %v829, %v997
        %999 = vmatmul.bf16.gmra.mxu0 %v563
        %v1000 = vpop.f32.mrf.mxu0
        %v1001 = vadd.f32 %v832, %v1000
        %v1002 = vpop.f32.mrf.mxu0
        %v1003 = vadd.f32 %v834, %v1002
        %1004 = vmatmul.bf16.gmra.mxu0 %v565
        %v1005 = vpop.f32.mrf.mxu0
        %v1006 = vadd.f32 %v837, %v1005
        %v1007 = vpop.f32.mrf.mxu0
        %v1008 = vadd.f32 %v839, %v1007
        %1009 = vmatmul.bf16.gmra.mxu0 %v567
        %v1010 = vpop.f32.mrf.mxu0
        %v1011 = vadd.f32 %v842, %v1010
        %v1012 = vpop.f32.mrf.mxu0
        %v1013 = vadd.f32 %v844, %v1012
        %1014 = vmatmul.bf16.gmra.mxu0 %v569
        %v1015 = vpop.f32.mrf.mxu0
        %v1016 = vadd.f32 %v847, %v1015
        %v1017 = vpop.f32.mrf.mxu0
        %v1018 = vadd.f32 %v849, %v1017
        %1019 = vmatmul.bf16.gmra.mxu0 %v571
        %v1020 = vpop.f32.mrf.mxu0
        %v1021 = vadd.f32 %v852, %v1020
        %v1022 = vpop.f32.mrf.mxu0
        %v1023 = vadd.f32 %v854, %v1022
        %1024 = vmatmul.bf16.gmra.mxu0 %v573
        %v1025 = vpop.f32.mrf.mxu0
        %v1026 = vadd.f32 %v857, %v1025
        %v1027 = vpop.f32.mrf.mxu0
        %v1028 = vadd.f32 %v859, %v1027
        %1029 = vmatmul.bf16.gmra.mxu0 %v575
        %v1030 = vpop.f32.mrf.mxu0
        %v1031 = vadd.f32 %v862, %v1030
        %v1032 = vpop.f32.mrf.mxu0
        %v1033 = vadd.f32 %v864, %v1032
        %1034 = vmatmul.bf16.gmra.mxu0 %v577
        %v1035 = vpop.f32.mrf.mxu0
        %v1036 = vadd.f32 %v867, %v1035
        %v1037 = vpop.f32.mrf.mxu0
        %v1038 = vadd.f32 %v869, %v1037
        %1039 = vmatmul.bf16.gmra.mxu0 %v579
        %v1040 = vpop.f32.mrf.mxu0
        %v1041 = vadd.f32 %v872, %v1040
        %v1042 = vpop.f32.mrf.mxu0
        %v1043 = vadd.f32 %v874, %v1042
        %1044 = vmatmul.bf16.gmra.mxu0 %v581
        %v1045 = vpop.f32.mrf.mxu0
        %v1046 = vadd.f32 %v877, %v1045
        %v1047 = vpop.f32.mrf.mxu0
        %v1048 = vadd.f32 %v879, %v1047
        %1049 = vmatmul.bf16.gmra.mxu0 %v583
        %v1050 = vpop.f32.mrf.mxu0
        %v1051 = vadd.f32 %v882, %v1050
        %v1052 = vpop.f32.mrf.mxu0
        %v1053 = vadd.f32 %v884, %v1052
        %1054 = vmatmul.bf16.gmra.mxu0 %v585
        %v1055 = vpop.f32.mrf.mxu0
        %v1056 = vadd.f32 %v887, %v1055
        %v1057 = vpop.f32.mrf.mxu0
        %v1058 = vadd.f32 %v889, %v1057
        %1059 = vmatmul.bf16.gmra.mxu0 %v587
        %v1060 = vpop.f32.mrf.mxu0
        %v1061 = vadd.f32 %v892, %v1060
        %v1062 = vpop.f32.mrf.mxu0
        %v1063 = vadd.f32 %v894, %v1062
        %1064 = vmatmul.bf16.gmra.mxu0 %v589
        %v1065 = vpop.f32.mrf.mxu0
        %v1066 = vadd.f32 %v897, %v1065
        %v1067 = vpop.f32.mrf.mxu0
        %v1068 = vadd.f32 %v899, %v1067
        %1069 = vmatmul.bf16.gmra.mxu0 %v591
        %v1070 = vpop.f32.mrf.mxu0
        %v1071 = vadd.f32 %v902, %v1070
        %v1072 = vpop.f32.mrf.mxu0
        %v1073 = vadd.f32 %v904, %v1072
        %1074 = vmatmul.bf16.gmra.mxu0 %v593
        %v1075 = vpop.f32.mrf.mxu0
        %v1076 = vadd.f32 %v907, %v1075
        %v1077 = vpop.f32.mrf.mxu0
        %v1078 = vadd.f32 %v909, %v1077
        %1079 = vmatmul.bf16.gmra.mxu0 %v595
        %v1080 = vpop.f32.mrf.mxu0
        %v1081 = vadd.f32 %v912, %v1080
        %v1082 = vpop.f32.mrf.mxu0
        %v1083 = vadd.f32 %v914, %v1082
        %1084 = vmatmul.bf16.gmra.mxu0 %v597
        %v1085 = vpop.f32.mrf.mxu0
        %v1086 = vadd.f32 %v917, %v1085
        %v1087 = vpop.f32.mrf.mxu0
        %v1088 = vadd.f32 %v919, %v1087
        %1089 = vmatmul.bf16.gmra.mxu0 %v599
        %v1090 = vpop.f32.mrf.mxu0
        %v1091 = vadd.f32 %v922, %v1090
        %v1092 = vpop.f32.mrf.mxu0
        %v1093 = vadd.f32 %v924, %v1092
        %1094 = vmatmul.bf16.gmra.mxu0 %v601
        %v1095 = vpop.f32.mrf.mxu0
        %v1096 = vadd.f32 %v927, %v1095
        %v1097 = vpop.f32.mrf.mxu0
        %v1098 = vadd.f32 %v929, %v1097
        %1099 = vdwg.mxu0
        %v1100 = vmax.f32 %v941, 0.0
        %v1101 = vmax.f32 %v943, 0.0
        %v1102 = vmax.f32 %v946, 0.0
        %v1103 = vmax.f32 %v948, 0.0
        %v1104 = vmax.f32 %v951, 0.0
        %v1105 = vmax.f32 %v953, 0.0
        %v1106 = vmax.f32 %v956, 0.0
        %v1107 = vmax.f32 %v958, 0.0
        %v1108 = vmax.f32 %v961, 0.0
        %v1109 = vmax.f32 %v963, 0.0
        %v1110 = vmax.f32 %v966, 0.0
        %v1111 = vmax.f32 %v968, 0.0
        %v1112 = vmax.f32 %v971, 0.0
        %v1113 = vmax.f32 %v973, 0.0
        %v1114 = vmax.f32 %v976, 0.0
        %v1115 = vmax.f32 %v978, 0.0
        %v1116 = vmax.f32 %v981, 0.0
        %v1117 = vmax.f32 %v983, 0.0
        %v1118 = vmax.f32 %v986, 0.0
        %v1119 = vmax.f32 %v988, 0.0
        %v1120 = vmax.f32 %v991, 0.0
        %v1121 = vmax.f32 %v993, 0.0
        %v1122 = vmax.f32 %v996, 0.0
        %v1123 = vmax.f32 %v998, 0.0
        %v1124 = vmax.f32 %v1001, 0.0
        %v1125 = vmax.f32 %v1003, 0.0
        %v1126 = vmax.f32 %v1006, 0.0
        %v1127 = vmax.f32 %v1008, 0.0
        %v1128 = vmax.f32 %v1011, 0.0
        %v1129 = vmax.f32 %v1013, 0.0
        %v1130 = vmax.f32 %v1016, 0.0
        %v1131 = vmax.f32 %v1018, 0.0
        %v1132 = vmax.f32 %v1021, 0.0
        %v1133 = vmax.f32 %v1023, 0.0
        %v1134 = vmax.f32 %v1026, 0.0
        %v1135 = vmax.f32 %v1028, 0.0
        %v1136 = vmax.f32 %v1031, 0.0
        %v1137 = vmax.f32 %v1033, 0.0
        %v1138 = vmax.f32 %v1036, 0.0
        %v1139 = vmax.f32 %v1038, 0.0
        %v1140 = vmax.f32 %v1041, 0.0
        %v1141 = vmax.f32 %v1043, 0.0
        %v1142 = vmax.f32 %v1046, 0.0
        %v1143 = vmax.f32 %v1048, 0.0
        %v1144 = vmax.f32 %v1051, 0.0
        %v1145 = vmax.f32 %v1053, 0.0
        %v1146 = vmax.f32 %v1056, 0.0
        %v1147 = vmax.f32 %v1058, 0.0
        %v1148 = vmax.f32 %v1061, 0.0
        %v1149 = vmax.f32 %v1063, 0.0
        %v1150 = vmax.f32 %v1066, 0.0
        %v1151 = vmax.f32 %v1068, 0.0
        %v1152 = vmax.f32 %v1071, 0.0
        %v1153 = vmax.f32 %v1073, 0.0
        %v1154 = vmax.f32 %v1076, 0.0
        %v1155 = vmax.f32 %v1078, 0.0
        %v1156 = vmax.f32 %v1081, 0.0
        %v1157 = vmax.f32 %v1083, 0.0
        %v1158 = vmax.f32 %v1086, 0.0
        %v1159 = vmax.f32 %v1088, 0.0
        %v1160 = vmax.f32 %v1091, 0.0
        %v1161 = vmax.f32 %v1093, 0.0
        %v1162 = vmax.f32 %v1096, 0.0
        %v1163 = vmax.f32 %v1098, 0.0
        %v1164 = vpack.c.bf16 %v1100, %v1100
        %v1165 = vpack.c.bf16 %v1101, %v1101
        %v1166 = vpack.c.bf16 %v1102, %v1102
        %v1167 = vpack.c.bf16 %v1103, %v1103
        %v1168 = vpack.c.bf16 %v1104, %v1104
        %v1169 = vpack.c.bf16 %v1105, %v1105
        %v1170 = vpack.c.bf16 %v1106, %v1106
        %v1171 = vpack.c.bf16 %v1107, %v1107
        %v1172 = vpack.c.bf16 %v1108, %v1108
        %v1173 = vpack.c.bf16 %v1109, %v1109
        %v1174 = vpack.c.bf16 %v1110, %v1110
        %v1175 = vpack.c.bf16 %v1111, %v1111
        %v1176 = vpack.c.bf16 %v1112, %v1112
        %v1177 = vpack.c.bf16 %v1113, %v1113
        %v1178 = vpack.c.bf16 %v1114, %v1114
        %v1179 = vpack.c.bf16 %v1115, %v1115
        %v1180 = vpack.c.bf16 %v1116, %v1116
        %v1181 = vpack.c.bf16 %v1117, %v1117
        %v1182 = vpack.c.bf16 %v1118, %v1118
        %v1183 = vpack.c.bf16 %v1119, %v1119
        %v1184 = vpack.c.bf16 %v1120, %v1120
        %v1185 = vpack.c.bf16 %v1121, %v1121
        %v1186 = vpack.c.bf16 %v1122, %v1122
        %v1187 = vpack.c.bf16 %v1123, %v1123
        %v1188 = vpack.c.bf16 %v1124, %v1124
        %v1189 = vpack.c.bf16 %v1125, %v1125
        %v1190 = vpack.c.bf16 %v1126, %v1126
        %v1191 = vpack.c.bf16 %v1127, %v1127
        %v1192 = vpack.c.bf16 %v1128, %v1128
        %v1193 = vpack.c.bf16 %v1129, %v1129
        %v1194 = vpack.c.bf16 %v1130, %v1130
        %v1195 = vpack.c.bf16 %v1131, %v1131
        %v1196 = vpack.c.bf16 %v1132, %v1132
        %v1197 = vpack.c.bf16 %v1133, %v1133
        %v1198 = vpack.c.bf16 %v1134, %v1134
        %v1199 = vpack.c.bf16 %v1135, %v1135
        %v1200 = vpack.c.bf16 %v1136, %v1136
        %v1201 = vpack.c.bf16 %v1137, %v1137
        %v1202 = vpack.c.bf16 %v1138, %v1138
        %v1203 = vpack.c.bf16 %v1139, %v1139
        %v1204 = vpack.c.bf16 %v1140, %v1140
        %v1205 = vpack.c.bf16 %v1141, %v1141
        %v1206 = vpack.c.bf16 %v1142, %v1142
        %v1207 = vpack.c.bf16 %v1143, %v1143
        %v1208 = vpack.c.bf16 %v1144, %v1144
        %v1209 = vpack.c.bf16 %v1145, %v1145
        %v1210 = vpack.c.bf16 %v1146, %v1146
        %v1211 = vpack.c.bf16 %v1147, %v1147
        %v1212 = vpack.c.bf16 %v1148, %v1148
        %v1213 = vpack.c.bf16 %v1149, %v1149
        %v1214 = vpack.c.bf16 %v1150, %v1150
        %v1215 = vpack.c.bf16 %v1151, %v1151
        %v1216 = vpack.c.bf16 %v1152, %v1152
        %v1217 = vpack.c.bf16 %v1153, %v1153
        %v1218 = vpack.c.bf16 %v1154, %v1154
        %v1219 = vpack.c.bf16 %v1155, %v1155
        %v1220 = vpack.c.bf16 %v1156, %v1156
        %v1221 = vpack.c.bf16 %v1157, %v1157
        %v1222 = vpack.c.bf16 %v1158, %v1158
        %v1223 = vpack.c.bf16 %v1159, %v1159
        %v1224 = vpack.c.bf16 %v1160, %v1160
        %v1225 = vpack.c.bf16 %v1161, %v1161
        %v1226 = vpack.c.bf16 %v1162, %v1162
        %v1227 = vpack.c.bf16 %v1163, %v1163
        %1228 = vst [vmem:[%s240] sm:$0xf] %v1164
        %1229 = vst [vmem:[%s240 + $0x4] sm:$0xf] %v1165
        %1230 = vst [vmem:[%s240 + $0x8] sm:$0xf] %v1166
        %1231 = vst [vmem:[%s240 + $0xc] sm:$0xf] %v1167
        %1232 = vst [vmem:[%s240 + $0x10] sm:$0xf] %v1168
        %1233 = vst [vmem:[%s240 + $0x14] sm:$0xf] %v1169
        %1234 = vst [vmem:[%s240 + $0x18] sm:$0xf] %v1170
        %1235 = vst [vmem:[%s240 + $0x1c] sm:$0xf] %v1171
        %1236 = vst [vmem:[%s240 + $0x20] sm:$0xf] %v1172
        %1237 = vst [vmem:[%s240 + $0x24] sm:$0xf] %v1173
        %1238 = vst [vmem:[%s240 + $0x28] sm:$0xf] %v1174
        %1239 = vst [vmem:[%s240 + $0x2c] sm:$0xf] %v1175
        %1240 = vst [vmem:[%s240 + $0x30] sm:$0xf] %v1176
        %1241 = vst [vmem:[%s240 + $0x34] sm:$0xf] %v1177
        %1242 = vst [vmem:[%s240 + $0x38] sm:$0xf] %v1178
        %1243 = vst [vmem:[%s240 + $0x3c] sm:$0xf] %v1179
        %1244 = vst [vmem:[%s240 + $0x40] sm:$0xf] %v1180
        %1245 = vst [vmem:[%s240 + $0x44] sm:$0xf] %v1181
        %1246 = vst [vmem:[%s240 + $0x48] sm:$0xf] %v1182
        %1247 = vst [vmem:[%s240 + $0x4c] sm:$0xf] %v1183
        %1248 = vst [vmem:[%s240 + $0x50] sm:$0xf] %v1184
        %1249 = vst [vmem:[%s240 + $0x54] sm:$0xf] %v1185
        %1250 = vst [vmem:[%s240 + $0x58] sm:$0xf] %v1186
        %1251 = vst [vmem:[%s240 + $0x5c] sm:$0xf] %v1187
        %1252 = vst [vmem:[%s240 + $0x60] sm:$0xf] %v1188
        %1253 = vst [vmem:[%s240 + $0x64] sm:$0xf] %v1189
        %1254 = vst [vmem:[%s240 + $0x68] sm:$0xf] %v1190
        %1255 = vst [vmem:[%s240 + $0x6c] sm:$0xf] %v1191
        %1256 = vst [vmem:[%s240 + $0x70] sm:$0xf] %v1192
        %1257 = vst [vmem:[%s240 + $0x74] sm:$0xf] %v1193
        %1258 = vst [vmem:[%s240 + $0x78] sm:$0xf] %v1194
        %1259 = vst [vmem:[%s240 + $0x7c] sm:$0xf] %v1195
        %1260 = vst [vmem:[%s240 + $0x80] sm:$0xf] %v1196
        %1261 = vst [vmem:[%s240 + $0x84] sm:$0xf] %v1197
        %1262 = vst [vmem:[%s240 + $0x88] sm:$0xf] %v1198
        %1263 = vst [vmem:[%s240 + $0x8c] sm:$0xf] %v1199
        %1264 = vst [vmem:[%s240 + $0x90] sm:$0xf] %v1200
        %1265 = vst [vmem:[%s240 + $0x94] sm:$0xf] %v1201
        %1266 = vst [vmem:[%s240 + $0x98] sm:$0xf] %v1202
        %1267 = vst [vmem:[%s240 + $0x9c] sm:$0xf] %v1203
        %1268 = vst [vmem:[%s240 + $0xa0] sm:$0xf] %v1204
        %1269 = vst [vmem:[%s240 + $0xa4] sm:$0xf] %v1205
        %1270 = vst [vmem:[%s240 + $0xa8] sm:$0xf] %v1206
        %1271 = vst [vmem:[%s240 + $0xac] sm:$0xf] %v1207
        %1272 = vst [vmem:[%s240 + $0xb0] sm:$0xf] %v1208
        %1273 = vst [vmem:[%s240 + $0xb4] sm:$0xf] %v1209
        %1274 = vst [vmem:[%s240 + $0xb8] sm:$0xf] %v1210
        %1275 = vst [vmem:[%s240 + $0xbc] sm:$0xf] %v1211
        %1276 = vst [vmem:[%s240 + $0xc0] sm:$0xf] %v1212
        %1277 = vst [vmem:[%s240 + $0xc4] sm:$0xf] %v1213
        %1278 = vst [vmem:[%s240 + $0xc8] sm:$0xf] %v1214
        %1279 = vst [vmem:[%s240 + $0xcc] sm:$0xf] %v1215
        %1280 = vst [vmem:[%s240 + $0xd0] sm:$0xf] %v1216
        %1281 = vst [vmem:[%s240 + $0xd4] sm:$0xf] %v1217
        %1282 = vst [vmem:[%s240 + $0xd8] sm:$0xf] %v1218
        %1283 = vst [vmem:[%s240 + $0xdc] sm:$0xf] %v1219
        %1284 = vst [vmem:[%s240 + $0xe0] sm:$0xf] %v1220
        %1285 = vst [vmem:[%s240 + $0xe4] sm:$0xf] %v1221
        %1286 = vst [vmem:[%s240 + $0xe8] sm:$0xf] %v1222
        %1287 = vst [vmem:[%s240 + $0xec] sm:$0xf] %v1223
        %1288 = vst [vmem:[%s240 + $0xf0] sm:$0xf] %v1224
        %1289 = vst [vmem:[%s240 + $0xf4] sm:$0xf] %v1225
        %1290 = vst [vmem:[%s240 + $0xf8] sm:$0xf] %v1226
        %1291 = vst [vmem:[%s240 + $0xfc] sm:$0xf] %v1227
        %s1292 = sand.u32 %s121, 1
        %s1293 = scalar_lea.sflag [#allocation4], %s1292
        %s1294 = sand.u32 %s121, 1
        %s1295 = smul.addr %s1294, 256
        %s1296 = scalar_lea.vmem [#allocation7], %s1295
        // Predicated region
        $region41: #{tpu_custom_call.1} parent=31 // pred_check
          %p1297 = pneg %p131
        $region42: #{tpu_custom_call.1} parent=31 // pred_check_branch
          %1299 = sbr.rel (%p1297) target = $region44
        $region43: #{tpu_custom_call.1} parent=31 // pred_region
          %s1300 = smul.u32 64, %s25
          %1302 = vsyncadd %s1293, 0
          %s1303 = sadd.s32 %s26, %s1300
          %s1304 = smul.addr %s1303, 4
          %s1305 = scalar_lea.hbm %s3, %s1304
          %s1306 = sshll.u32 %s1296, 4
          %s1307 = int_to_ptr.vmem [resolvable:$true] %s1306
          %s1308 = sshll.u32 %s1305, 4
          %s1309 = int_to_ptr.hbm [resolvable:$true] %s1308
          %1314 = dma.vmem_to_hbm [thread:$0]  %s1307, 4096, %s1309, %s1293, 64, 64, 4
        $region44: #{tpu_custom_call.1} parent=31 // pred_fallthru
          _
      $region32: #{tpu_custom_call.1} parent=5 // pred_fallthru
        _
      %p1315 = scmp.le.s32.totalorder 2, %s16
      // Predicated region
      $region45: #{tpu_custom_call.1} parent=5 // pred_check
        %p1316 = pneg %p1315
      $region46: #{tpu_custom_call.1} parent=5 // pred_check_branch
        %1318 = sbr.rel (%p1316) target = $region48
      $region47: #{tpu_custom_call.1} parent=5 // pred_region
        %s1319 = ssub.s32 %s16, 2
        // Predicated region
        $region49: #{tpu_custom_call.1} parent=47 // pred_check
          %p1320 = pneg %p137
        $region50: #{tpu_custom_call.1} parent=47 // pred_check_branch
          %1322 = sbr.rel (%p1320) target = $region52
        $region51: #{tpu_custom_call.1} parent=47 // pred_region
          %s1323 = sand.u32 %s122, 1
          %s1324 = scalar_lea.sflag [#allocation4], %s1323
          %s1325 = sand.u32 %s122, 1
          %s1326 = smul.addr %s1325, 256
          %s1327 = scalar_lea.vmem [#allocation7], %s1326
          %1329 = dma.done %s1324, 4096
        $region52: #{tpu_custom_call.1} parent=47 // pred_fallthru
          _
      $region48: #{tpu_custom_call.1} parent=5 // pred_fallthru
        _
    $region6: #{tpu_custom_call.1} parent=1 // loop_footer
      %s20 = sadd.s32 1, %s16
    $region7: #{tpu_custom_call.1} parent=1 // loop_footer_branch
      %15 = sbr.rel target = $region3
    $region8: #{tpu_custom_call.1} parent=1 // loop_exit
      _
    %1330 = vsyncpa [#allocation3], 1
    %s1331 = scalar_lea.sflag [#allocation3], 1
    %1332 = vsyncpa %s1331, 1
    %1333 = vsyncpa [#allocation6], 1
    %1334 = vsyncpa [#allocation4], 1
    %s1335 = scalar_lea.sflag [#allocation4], 1
    %1336 = vsyncpa %s1335, 1

</llo_original>
